<compile_context>
chip_gen: v7x
topology: tpu7x:2x2x1
jax: 0.10.0
libtpu: 0.0.40
codegen_flags: <defaults>
</compile_context>

<pallas_src>
import functools

import jax
import jax.numpy as jnp
from jax.experimental import pallas as pl
from jax.experimental.pallas import tpu as pltpu


def _round_up(x, m):
    return (x + m - 1) // m * m


# --------------------------------------------------------------------------------------
# Kernel 1: fused projection  hf = x @ [W | W@a1 | W@a2 | 0-pad]   (row-tiled)
# --------------------------------------------------------------------------------------
def gat_proj_kernel(x_ref, w_ref, hf_ref):
    hf_ref[...] = jnp.dot(
        x_ref[...], w_ref[...], preferred_element_type=jnp.float32
    ).astype(hf_ref.dtype)


# --------------------------------------------------------------------------------------
# Kernel 2: masked online-softmax aggregation  out = ELU( softmax_adj(e) @ h )
# grid = (row_tiles [parallel], col_tiles [arbitrary])
# --------------------------------------------------------------------------------------
def gat_attn_kernel(f1_ref, f2_ref, adj_ref, hv_ref, o_ref,
                    m_ref, l_ref, acc_ref, *, alpha, concat, approx_recip):
    k = pl.program_id(1)
    nk = pl.num_programs(1)

    @pl.when(k == 0)
    def _():
        m_ref[...] = jnp.full_like(m_ref, -1e30)
        l_ref[...] = jnp.zeros_like(l_ref)
        acc_ref[...] = jnp.zeros_like(acc_ref)

    f1 = f1_ref[...]                      # (tm, 1)   f32 query-side logit
    f2 = f2_ref[...]                      # (1,  tn)  f32 key-side logit
    mask = adj_ref[...] > 0               # (tm, tn)  int8 edge mask -> bool

    # e_ij = LeakyReLU(f1_i + f2_j); masked logits clamped to -1e30 (kept in f32 —
    # do NOT narrow, -1e30 overflows bf16).
    e = f1 + f2
    em = jnp.where(mask, jnp.where(e > 0.0, e, alpha * e), jnp.float32(-1e30))

    m_prev = m_ref[...]                                           # (tm, 1)
    m_new = jnp.maximum(m_prev, jnp.max(em, axis=1, keepdims=True))
    p = jnp.where(mask, jnp.exp(em - m_new), 0.0)                 # (tm, tn) f32
    scale = jnp.exp(m_prev - m_new)                               # (tm, 1)

    l_ref[...] = scale * l_ref[...] + jnp.sum(p, axis=1, keepdims=True)
    hv = hv_ref[...]                                              # (tn, Fe)
    acc_ref[...] = scale * acc_ref[...] + jnp.dot(
        p.astype(hv.dtype), hv, preferred_element_type=jnp.float32)
    m_ref[...] = m_new

    @pl.when(k == nk - 1)
    def _():
        l = l_ref[...]
        inv = pl.reciprocal(jnp.where(l > 0.0, l, 1.0), approx=approx_recip)
        out = acc_ref[...] * inv                                  # rows w/o edges -> 0
        if concat:
            # ELU(alpha=1), matching F.elu default
            out = jnp.where(out > 0.0, out, jnp.exp(jnp.minimum(out, 0.0)) - 1.0)
        o_ref[...] = out.astype(o_ref.dtype)


# --------------------------------------------------------------------------------------
# Wrapper
# --------------------------------------------------------------------------------------
def gat_layer_sparse(x, W, a, adj_mask, *, alpha, concat=True,
                     block_m=128, block_n=128,
                     mxu_dtype=jnp.float32, approx_recip=False):
    N, Din = x.shape
    F = W.shape[1]
    assert a.shape == (2 * F, 1)

    # ---- wrapper glue: fused projection weights, lane-dense padding, int8 adjacency ----
    Wa1 = W @ a[:F, :]                                   # (Din, 1)
    Wa2 = W @ a[F:, :]                                   # (Din, 1)
    Fe = _round_up(F + 2, 128)                           # lane-dense projected width
    W_ext = jnp.concatenate(
        [W, Wa1, Wa2, jnp.zeros((Din, Fe - (F + 2)), W.dtype)], axis=1)

    Np = _round_up(N, max(block_m, block_n))
    x_p = jnp.zeros((Np, Din), x.dtype).at[:N].set(x)
    adj_p = jnp.zeros((Np, Np), jnp.int8).at[:N, :N].set(
        (adj_mask > 0).astype(jnp.int8))                 # int8 edge mask (4x smaller DMA)

    grid_m = Np // block_m
    grid_n = Np // block_n

    # ---- Kernel 1: hf = x @ W_ext  (one MXU pass yields h | f1 | f2) -------------------
    hf = pl.pallas_call(
        gat_proj_kernel,
        out_shape=jax.ShapeDtypeStruct((Np, Fe), jnp.float32),
        grid_spec=pltpu.PrefetchScalarGridSpec(
            num_scalar_prefetch=0,
            grid=(grid_m,),
            in_specs=[
                pl.BlockSpec((block_m, Din), lambda i: (i, 0)),
                pl.BlockSpec((Din, Fe), lambda i: (0, 0)),
            ],
            out_specs=pl.BlockSpec((block_m, Fe), lambda i: (i, 0)),
        ),
        compiler_params=pltpu.CompilerParams(dimension_semantics=("parallel",)),
    )(x_p.astype(mxu_dtype), W_ext.astype(mxu_dtype))

    f1 = hf[:, F:F + 1]                     # (Np, 1)  query-side logits (f32)
    f2r = hf[:, F + 1:F + 2].T              # (1, Np)  key-side logits, row layout (f32)
    hv = hf.astype(mxu_dtype)               # values for att @ h (lane-dense width Fe)

    # ---- Kernel 2: online masked softmax + aggregation ---------------------------------
    kernel = functools.partial(gat_attn_kernel, alpha=float(alpha),
                               concat=concat, approx_recip=approx_recip)
    out_p = pl.pallas_call(
        kernel,
        out_shape=jax.ShapeDtypeStruct((Np, Fe), jnp.float32),
        grid_spec=pltpu.PrefetchScalarGridSpec(
            num_scalar_prefetch=0,
            grid=(grid_m, grid_n),
            in_specs=[
                pl.BlockSpec((block_m, 1), lambda i, k: (i, 0)),        # f1
                pl.BlockSpec((1, block_n), lambda i, k: (0, k)),        # f2 (row)
                pl.BlockSpec((block_m, block_n), lambda i, k: (i, k)),  # adj (int8)
                pl.BlockSpec((block_n, Fe), lambda i, k: (k, 0)),       # h values
            ],
            out_specs=pl.BlockSpec((block_m, Fe), lambda i, k: (i, 0)),
            scratch_shapes=[
                pltpu.VMEM((block_m, 1), jnp.float32),    # running max
                pltpu.VMEM((block_m, 1), jnp.float32),    # running sum
                pltpu.VMEM((block_m, Fe), jnp.float32),   # unnormalized accumulator
            ],
        ),
        compiler_params=pltpu.CompilerParams(
            dimension_semantics=("parallel", "arbitrary"),
            vmem_limit_bytes=32 * 1024 * 1024,            # tiles sized well under v7x 64MiB
        ),
    )(f1, f2r, adj_p, hv)

    return out_p[:N, :F]


# --------------------------------------------------------------------------------------
# Pure-JAX reference matching the PyTorch sparse-GAT semantics
# --------------------------------------------------------------------------------------
def _reference(x, W, a, adj_mask, *, alpha, concat=True):
    F = W.shape[1]
    h = x @ W
    f1 = h @ a[:F, :]                     # (N, 1)
    f2 = h @ a[F:, :]                     # (N, 1)
    e = f1 + f2.T
    e = jnp.where(e > 0, e, alpha * e)
    mask = adj_mask > 0
    em = jnp.where(mask, e, -1e30)
    m = jnp.max(em, axis=1, keepdims=True)
    p = jnp.where(mask, jnp.exp(em - m), 0.0)
    s = jnp.sum(p, axis=1, keepdims=True)
    att = p / jnp.where(s > 0, s, 1.0)
    hp = att @ h
    if concat:
        hp = jnp.where(hp > 0, hp, jnp.exp(jnp.minimum(hp, 0.0)) - 1.0)
    return hp


if __name__ == "__main__":
    # Small deterministic setup (N not a multiple of the 128 tile -> exercises padding,
    # and N > 128 -> exercises the multi-tile online softmax).
    N = 200
    in_features = 32
    out_features = 16
    alpha = 0.2

    key = jax.random.PRNGKey(0)
    k_x, k_w, k_a, k_adj = jax.random.split(key, 4)

    x = jax.random.normal(k_x, (N, in_features), dtype=jnp.float32)

    # Xavier-uniform init with gain=1.414 (as in the PyTorch module)
    gain = 1.414
    w_bound = gain * (6.0 / (in_features + out_features)) ** 0.5
    W = jax.random.uniform(k_w, (in_features, out_features),
                           minval=-w_bound, maxval=w_bound, dtype=jnp.float32)
    a_bound = gain * (6.0 / (2 * out_features + 1)) ** 0.5
    a = jax.random.uniform(k_a, (2 * out_features, 1),
                           minval=-a_bound, maxval=a_bound, dtype=jnp.float32)

    # Random sparse adjacency as an int8 edge mask, with self-loops so every row
    # has at least one edge.  (The sparse COO edge list of the PyTorch module is
    # represented as a dense edge mask; see TODO below.)
    adj = (jax.random.uniform(k_adj, (N, N)) < 0.05).astype(jnp.int8)
    adj = jnp.maximum(adj, jnp.eye(N, dtype=jnp.int8))

    ref = _reference(x, W, a, adj, alpha=alpha, concat=True)

    # f32 MXU path: bit-for-bit faithful, tight tolerance.
    out = gat_layer_sparse(x, W, a, adj, alpha=alpha, concat=True)
    out = jax.block_until_ready(out)
    assert out.shape == (N, out_features)
    assert jnp.allclose(out, ref, atol=1e-3, rtol=1e-3), "f32 kernel mismatch vs reference"

    # bf16-MXU path (v6e/v7x optimization): softmax / mask math stays f32 in-kernel.
    out_bf16 = gat_layer_sparse(x, W, a, adj, alpha=alpha, concat=True,
                                mxu_dtype=jnp.bfloat16, approx_recip=True)
    out_bf16 = jax.block_until_ready(out_bf16)
    assert out_bf16.shape == (N, out_features)
    assert jnp.allclose(out_bf16, ref, atol=2e-1, rtol=2e-1), "bf16 kernel mismatch vs reference"

    # TODO(synk): a true COO edge-list (torch.sparse) gather/scatter path is not expressed;
    # edges are carried as a dense int8 mask and the softmax is masked accordingly.
    print("KERNEL_OK")
</pallas_src>

<mosaic_0001>
module attributes {stable_mosaic.version = 11 : i64} {
  func.func @gat_proj_kernel(%arg0: i32, %arg1: memref<128x32xf32, #tpu.memory_space<vmem>>, %arg2: memref<32x128xf32, #tpu.memory_space<vmem>>, %arg3: memref<128x128xf32, #tpu.memory_space<vmem>>) attributes {dimension_semantics = [#tpu.dimension_semantics<parallel>], iteration_bounds = array<i64: 2>, scalar_prefetch = 0 : i64, scratch_operands = 0 : i64, tpu.core_type = #tpu.core_type<tc>, window_params = [{transform_indices = @transform_0, window_bounds = array<i64: 128, 32>}, {pipeline_mode = #tpu.pipeline_mode<synchronous>, transform_indices = @transform_1, window_bounds = array<i64: 32, 128>}, {transform_indices = @transform_2, window_bounds = array<i64: 128, 128>}]} {
    %c0 = arith.constant 0 : index
    %c0_0 = arith.constant 0 : index
    %0 = vector.load %arg1[%c0, %c0_0] : memref<128x32xf32, #tpu.memory_space<vmem>>, vector<128x32xf32>
    %c0_1 = arith.constant 0 : index
    %c0_2 = arith.constant 0 : index
    %1 = vector.load %arg2[%c0_1, %c0_2] : memref<32x128xf32, #tpu.memory_space<vmem>>, vector<32x128xf32>
    %cst = arith.constant dense<0.000000e+00> : vector<128x128xf32>
    %2 = tpu.matmul %0, %1, %cst {dimension_numbers = #tpu.dot_dimension_numbers<[1], [0], [0], [1], [0, 0, 1, 1], [], []>} : vector<128x32xf32>, vector<32x128xf32>, vector<128x128xf32> -> vector<128x128xf32>
    %c0_3 = arith.constant 0 : index
    %c0_4 = arith.constant 0 : index
    %3 = vector.load %arg3[%c0_3, %c0_4] : memref<128x128xf32, #tpu.memory_space<vmem>>, vector<128x128xf32>
    tpu.vector_store %arg3[%c0_3, %c0_4], %2 {strides = array<i32>} : memref<128x128xf32, #tpu.memory_space<vmem>>, vector<128x128xf32>,
    return
  }
  func.func @transform_0(%arg0: i32) -> (i32, i32) {
    %c0_i32 = arith.constant 0 : i32
    %c0_i32_0 = arith.constant 0 : i32
    return %arg0, %c0_i32 : i32, i32
  }
  func.func @transform_1(%arg0: i32) -> (i32, i32) {
    %c0_i32 = arith.constant 0 : i32
    %c0_i32_0 = arith.constant 0 : i32
    %c0_i32_1 = arith.constant 0 : i32
    return %c0_i32, %c0_i32_0 : i32, i32
  }
  func.func @transform_2(%arg0: i32) -> (i32, i32) {
    %c0_i32 = arith.constant 0 : i32
    %c0_i32_0 = arith.constant 0 : i32
    return %arg0, %c0_i32 : i32, i32
  }
}

</mosaic_0001>

<llo_original>
// kernel: tpu_custom_call.1
$region0: #{tpu_custom_call.1}
  #allocation0 [shape = 'u32[]', space=smem, size = 0x4, offset = 0x4, fixed_abs, tag = 'smem constant byte address 0x4 - core index']
  #allocation1 [shape = 'u32[144,128]{1,0:T(1,128)}', space=vmem, size = 0x12000, scoped, tag = 'internal scratch']
  %s0 = inlined_call_operand.vmem [shape: f32[256,32], index: 0, kind: input, shape index: {}]
  %s1 = inlined_call_operand.vmem [shape: f32[32,128], index: 1, kind: input, shape index: {}]
  %s2 = inlined_call_operand.hbm [shape: f32[256,128], index: 2, kind: output, shape index: {}]
  %s3 = sld [smem:[#allocation0]]
  $region41: #{tpu_custom_call.1} parent=0
    _
  %s5 = ssub.s32 1, %s3
  %s6 = scalar_select 0, %s5, %s3
  $region1: #{tpu_custom_call.1} parent=0
    #allocation2 [shape = 'u8[131072]{0}', space=vmem, size = 0x20000, scoped, tag = 'output window, operand 0']
    #allocation3 [shape = 's32[2]{0}', space=sflag, size = 0x8, scoped, tag = 'scoped memory for tpu_custom_call.1']
    %7 = vsyncpa [#allocation3], 0
    %s8 = scalar_lea.sflag [#allocation3], 1
    %9 = vsyncpa %s8, 0
    loop: start=0, step=1, limit=4
    $region2: #{tpu_custom_call.1} parent=1 // loop_pre_header
      _
    $region3: #{tpu_custom_call.1} parent=1 // loop_header
      %s11 = sphi 0, %s15
      %p12 = scmp.ge.s32.totalorder %s11, 4
      %s21 = sphi 0, %s23
      %s24 = sphi 0, %s21
      %s25 = sphi 0, %s24
      %s41 = sphi 0, %s25
      %s45 = sphi 0, %s45
      %s47 = sphi 0, %s45
      %s48 = sphi 0, %s47
      %s62 = sphi 0, %s48
      %s68 = sphi 0, %s70
      %s71 = sphi 0, %s68
      %s72 = sphi 0, %s71
      %s88 = sphi 0, %s72
    $region4: #{tpu_custom_call.1} parent=1 // loop_header_branch
      %14 = sbr.rel (%p12) target = $region8
    $region5: #{tpu_custom_call.1} parent=1 // loop_body
      %s16 = ssub.s32 %s11, 1
      %s17 = ssub.s32 %s11, 2
      %s18 = sadd.s32 %s11, 1
      %s19 = ssub.s32 %s11, %s18
      %p20 = scmp.eq.s32.totalorder %s19, 0
      %s22 = sadd.s32 %s21, 1
      %s23 = scalar_select %p20, %s21, %s22
      %p26 = pneg %p20
      %p27 = scmp.eq.s32.totalorder %s11, 1
      %p28 = por %p26, %p27
      %p29 = scmp.ne.s32.totalorder %s21, %s24
      %p30 = scmp.eq.s32.totalorder %s11, 0
      %p31 = por %p29, %p30
      %p32 = scmp.ne.s32.totalorder %s21, %s24
      %p33 = scmp.eq.s32.totalorder %s16, 1
      %p34 = por %p32, %p33
      %p35 = scmp.ne.s32.totalorder %s24, %s25
      %p36 = scmp.eq.s32.totalorder %s16, 0
      %p37 = por %p35, %p36
      %p38 = scmp.ne.s32.totalorder %s24, %s25
      %p39 = scmp.eq.s32.totalorder %s17, 1
      %p40 = por %p38, %p39
      %p42 = scmp.ne.s32.totalorder %s25, %s41
      %p43 = scmp.eq.s32.totalorder %s17, 0
      %p44 = por %p42, %p43
      %s46 = sadd.s32 %s45, 1
      %p49 = scmp.eq.s32.totalorder %s11, 1
      %p50 = scmp.ne.s32.totalorder %s45, %s47
      %p51 = scmp.eq.s32.totalorder %s11, 0
      %p52 = por %p50, %p51
      %p53 = scmp.ne.s32.totalorder %s45, %s47
      %p54 = scmp.eq.s32.totalorder %s16, 1
      %p55 = por %p53, %p54
      %p56 = scmp.ne.s32.totalorder %s47, %s48
      %p57 = scmp.eq.s32.totalorder %s16, 0
      %p58 = por %p56, %p57
      %p59 = scmp.ne.s32.totalorder %s47, %s48
      %p60 = scmp.eq.s32.totalorder %s17, 1
      %p61 = por %p59, %p60
      %p63 = scmp.ne.s32.totalorder %s48, %s62
      %p64 = scmp.eq.s32.totalorder %s17, 0
      %p65 = por %p63, %p64
      %s66 = ssub.s32 %s11, %s18
      %p67 = scmp.eq.s32.totalorder %s66, 0
      %s69 = sadd.s32 %s68, 1
      %s70 = scalar_select %p67, %s68, %s69
      %p73 = pneg %p67
      %p74 = scmp.eq.s32.totalorder %s11, 1
      %p75 = por %p73, %p74
      %p76 = scmp.ne.s32.totalorder %s68, %s71
      %p77 = scmp.eq.s32.totalorder %s11, 0
      %p78 = por %p76, %p77
      %p79 = scmp.ne.s32.totalorder %s68, %s71
      %p80 = scmp.eq.s32.totalorder %s16, 1
      %p81 = por %p79, %p80
      %p82 = scmp.ne.s32.totalorder %s71, %s72
      %p83 = scmp.eq.s32.totalorder %s16, 0
      %p84 = por %p82, %p83
      %p85 = scmp.ne.s32.totalorder %s71, %s72
      %p86 = scmp.eq.s32.totalorder %s17, 1
      %p87 = por %p85, %p86
      %p89 = scmp.ne.s32.totalorder %s72, %s88
      %p90 = scmp.eq.s32.totalorder %s17, 0
      %p91 = por %p89, %p90
      %p92 = scmp.le.s32.totalorder 1, %s11
      %p93 = scmp.lt.s32.totalorder %s11, 3
      %p94 = pnand %p92, %p93
      %p95 = pneg %p94
      // Predicated region
      $region9: #{tpu_custom_call.1} parent=5 // pred_check
        _
      $region10: #{tpu_custom_call.1} parent=5 // pred_check_branch
        %97 = sbr.rel (%p94) target = $region12
      $region11: #{tpu_custom_call.1} parent=5 // pred_region
        %s98 = ssub.s32 %s11, 1
        // Predicated region
        $region13: #{tpu_custom_call.1} parent=11 // pred_check
          %p99 = pneg %p58
        $region14: #{tpu_custom_call.1} parent=11 // pred_check_branch
          %101 = sbr.rel (%p99) target = $region16
        $region15: #{tpu_custom_call.1} parent=11 // pred_region
          _
        $region16: #{tpu_custom_call.1} parent=11 // pred_fallthru
          _
      $region12: #{tpu_custom_call.1} parent=5 // pred_fallthru
        _
      %p102 = scmp.lt.s32.totalorder %s11, 2
      // Predicated region
      $region17: #{tpu_custom_call.1} parent=5 // pred_check
        %p103 = pneg %p102
      $region18: #{tpu_custom_call.1} parent=5 // pred_check_branch
        %105 = sbr.rel (%p103) target = $region20
      $region19: #{tpu_custom_call.1} parent=5 // pred_region
        // Predicated region
        $region21: #{tpu_custom_call.1} parent=19 // pred_check
          %p106 = pneg %p31
        $region22: #{tpu_custom_call.1} parent=19 // pred_check_branch
          %108 = sbr.rel (%p106) target = $region24
        $region23: #{tpu_custom_call.1} parent=19 // pred_region
          %s109 = smul.u32 16, %s11
          %p110 = scmp.lt.s32.totalorder %s109, 31
          %s111 = scalar_select %p110, %s109, 31
          %s112 = smul.addr %s111, 8
          %s113 = scalar_lea.vmem %s0, %s112
          %s114 = smul.u32 16, %s11
        $region24: #{tpu_custom_call.1} parent=19 // pred_fallthru
          _
      $region20: #{tpu_custom_call.1} parent=5 // pred_fallthru
        _
      %p115 = scmp.le.s32.totalorder 1, %s11
      %p116 = scmp.lt.s32.totalorder %s11, 3
      %p117 = pnand %p115, %p116
      %p118 = pneg %p117
      // Predicated region
      $region25: #{tpu_custom_call.1} parent=5 // pred_check
        _
      $region26: #{tpu_custom_call.1} parent=5 // pred_check_branch
        %120 = sbr.rel (%p117) target = $region28
      $region27: #{tpu_custom_call.1} parent=5 // pred_region
        %s121 = ssub.s32 %s11, 1
        %s122 = smul.u32 16, %s16
        %p123 = scmp.lt.s32.totalorder %s122, 31
        %s124 = scalar_select %p123, %s122, 31
        %s125 = smul.addr %s124, 8
        %s126 = scalar_lea.vmem %s0, %s125
        %p127 = pneg %p37
        %p128 = pneg %p34
        %p129 = pneg %p58
        %p130 = pneg %p55
        %p131 = pneg %p84
        %p132 = pneg %p81
        %s133 = sand.u32 %s71, 1
        %s134 = scalar_lea.sflag [#allocation3], %s133
        %s135 = sand.u32 %s71, 1
        %s136 = smul.addr %s135, 128
        %s137 = scalar_lea.vmem [#allocation2], %s136
        %s138 = smul.u32 16, %s16
        %p139 = scmp.lt.s32.totalorder %s138, 31
        %s140 = scalar_select %p139, %s138, 31
        %s141 = smul.addr %s140, 8
        %s142 = scalar_lea.vmem %s0, %s141
        %s143 = smul.u32 16, %s16
        %s144 = smul.u32 16, %s16
        %v145 = vld [vmem:[%s142] sm:$0xff]
        %v146 = vld [vmem:[%s142 + $0x8] sm:$0xff]
        %v147 = vld [vmem:[%s142 + $0x10] sm:$0xff]
        %v148 = vld [vmem:[%s142 + $0x18] sm:$0xff]
        %v149 = vld [vmem:[%s142 + $0x20] sm:$0xff]
        %v150 = vld [vmem:[%s142 + $0x28] sm:$0xff]
        %v151 = vld [vmem:[%s142 + $0x30] sm:$0xff]
        %v152 = vld [vmem:[%s142 + $0x38] sm:$0xff]
        %v153 = vld [vmem:[%s142 + $0x40] sm:$0xff]
        %v154 = vld [vmem:[%s142 + $0x48] sm:$0xff]
        %v155 = vld [vmem:[%s142 + $0x50] sm:$0xff]
        %v156 = vld [vmem:[%s142 + $0x58] sm:$0xff]
        %v157 = vld [vmem:[%s142 + $0x60] sm:$0xff]
        %v158 = vld [vmem:[%s142 + $0x68] sm:$0xff]
        %v159 = vld [vmem:[%s142 + $0x70] sm:$0xff]
        %v160 = vld [vmem:[%s142 + $0x78] sm:$0xff]
        %v161 = vld [vmem:[%s1] sm:$0xff]
        %v162 = vld [vmem:[%s1 + $0x8] sm:$0xff]
        %v163 = vld [vmem:[%s1 + $0x10] sm:$0xff]
        %v164 = vld [vmem:[%s1 + $0x18] sm:$0xff]
        %vm165 = vcmask 261120
        %v167 = vsel %vm165, %v145, 0
        %v170 = vsel %vm165, %v146, 0
        %v173 = vsel %vm165, %v147, 0
        %v176 = vsel %vm165, %v148, 0
        %v179 = vsel %vm165, %v149, 0
        %v182 = vsel %vm165, %v150, 0
        %v185 = vsel %vm165, %v151, 0
        %v188 = vsel %vm165, %v152, 0
        %v191 = vsel %vm165, %v153, 0
        %v194 = vsel %vm165, %v154, 0
        %v197 = vsel %vm165, %v155, 0
        %v200 = vsel %vm165, %v156, 0
        %v203 = vsel %vm165, %v157, 0
        %v206 = vsel %vm165, %v158, 0
        %v209 = vsel %vm165, %v159, 0
        %v212 = vsel %vm165, %v160, 0
        %214 = vmatprep.subr.mxu0 0.0
        %215 = vmatpush1.msra.mxu0 %v161
        %216 = vmatprep.subr.mxu0 0.0
        %217 = vmatpush1.msra.mxu0 %v162
        %218 = vmatprep.subr.mxu0 0.0
        %219 = vmatpush1.msra.mxu0 %v163
        %220 = vmatprep.subr.mxu0 0.0
        %221 = vmatpush1.msra.mxu0 %v164
        %222 = vmatprep.subr.mxu0 0.0
        %223 = vmatpush1.msra.mxu0 0.0
        %224 = vmatprep.subr.mxu0 0.0
        %225 = vmatpush1.msra.mxu0 0.0
        %226 = vmatprep.subr.mxu0 0.0
        %227 = vmatpush1.msra.mxu0 0.0
        %228 = vmatprep.subr.mxu0 0.0
        %229 = vmatpush1.msra.mxu0 0.0
        %230 = vmatprep.subr.mxu0 0.0
        %231 = vmatpush1.msra.mxu0 0.0
        %232 = vmatprep.subr.mxu0 0.0
        %233 = vmatpush1.msra.mxu0 0.0
        %234 = vmatprep.subr.mxu0 0.0
        %235 = vmatpush1.msra.mxu0 0.0
        %236 = vmatprep.subr.mxu0 0.0
        %237 = vmatpush1.msra.mxu0 0.0
        %238 = vmatprep.subr.mxu0 0.0
        %239 = vmatpush1.msra.mxu0 0.0
        %240 = vmatprep.subr.mxu0 0.0
        %241 = vmatpush1.msra.mxu0 0.0
        %242 = vmatprep.subr.mxu0 0.0
        %243 = vmatpush1.msra.mxu0 0.0
        %244 = vmatprep.subr.mxu0 0.0
        %245 = vmatpush1.msra.mxu0 0.0
        %246 = vmatprep.subr.mxu0 0.0
        %247 = vmatpush1.msra.mxu0 0.0
        %248 = vmatprep.subr.mxu0 0.0
        %249 = vmatpush1.msra.mxu0 0.0
        %250 = vmatprep.subr.mxu0 0.0
        %251 = vmatpush1.msra.mxu0 0.0
        %252 = vmatprep.subr.mxu0 0.0
        %253 = vmatpush1.msra.mxu0 0.0
        %254 = vmatprep.subr.mxu0 0.0
        %255 = vmatpush1.msra.mxu0 0.0
        %256 = vmatprep.subr.mxu0 0.0
        %257 = vmatpush1.msra.mxu0 0.0
        %258 = vmatprep.subr.mxu0 0.0
        %259 = vmatpush1.msra.mxu0 0.0
        %260 = vmatprep.subr.mxu0 0.0
        %261 = vmatpush1.msra.mxu0 0.0
        %262 = vmatprep.subr.mxu0 0.0
        %263 = vmatpush1.msra.mxu0 0.0
        %264 = vmatprep.subr.mxu0 0.0
        %265 = vmatpush1.msra.mxu0 0.0
        %266 = vmatprep.subr.mxu0 0.0
        %267 = vmatpush1.msra.mxu0 0.0
        %268 = vmatprep.subr.mxu0 0.0
        %269 = vmatpush1.msra.mxu0 0.0
        %270 = vmatprep.subr.mxu0 0.0
        %271 = vmatpush1.msra.mxu0 0.0
        %272 = vmatprep.subr.mxu0 0.0
        %273 = vmatpush1.msra.mxu0 0.0
        %274 = vmatprep.subr.mxu0 0.0
        %275 = vmatpush1.msra.mxu0 0.0
        %276 = vmatprep.subr.mxu0 0.0
        %277 = vmatpush1.msra.mxu0 0.0
        %278 = vmatprep.mubr.f32.mxu0 0.0
        %279 = vmatmul.mubr.f32.gmra.mrb[0].mxu0 %v167
        %v280 = vpop.f32.mrb[0].mxu0
        %v281 = vadd.f32 0.0, %v280
        %v282 = vpop.f32.mrb[0].mxu0
        %283 = vmatprep.mubr.f32.mxu0 0.0
        %284 = vmatmul.mubr.f32.gmra.mrb[0].mxu0 %v170
        %v285 = vpop.f32.mrb[0].mxu0
        %v286 = vadd.f32 0.0, %v285
        %v287 = vpop.f32.mrb[0].mxu0
        %288 = vmatprep.mubr.f32.mxu0 0.0
        %289 = vmatmul.mubr.f32.gmra.mrb[0].mxu0 %v173
        %v290 = vpop.f32.mrb[0].mxu0
        %v291 = vadd.f32 0.0, %v290
        %v292 = vpop.f32.mrb[0].mxu0
        %293 = vmatprep.mubr.f32.mxu0 0.0
        %294 = vmatmul.mubr.f32.gmra.mrb[0].mxu0 %v176
        %v295 = vpop.f32.mrb[0].mxu0
        %v296 = vadd.f32 0.0, %v295
        %v297 = vpop.f32.mrb[0].mxu0
        %298 = vmatprep.mubr.f32.mxu0 0.0
        %299 = vmatmul.mubr.f32.gmra.mrb[0].mxu0 %v179
        %v300 = vpop.f32.mrb[0].mxu0
        %v301 = vadd.f32 0.0, %v300
        %v302 = vpop.f32.mrb[0].mxu0
        %303 = vmatprep.mubr.f32.mxu0 0.0
        %304 = vmatmul.mubr.f32.gmra.mrb[0].mxu0 %v182
        %v305 = vpop.f32.mrb[0].mxu0
        %v306 = vadd.f32 0.0, %v305
        %v307 = vpop.f32.mrb[0].mxu0
        %308 = vmatprep.mubr.f32.mxu0 0.0
        %309 = vmatmul.mubr.f32.gmra.mrb[0].mxu0 %v185
        %v310 = vpop.f32.mrb[0].mxu0
        %v311 = vadd.f32 0.0, %v310
        %v312 = vpop.f32.mrb[0].mxu0
        %313 = vmatprep.mubr.f32.mxu0 0.0
        %314 = vmatmul.mubr.f32.gmra.mrb[0].mxu0 %v188
        %v315 = vpop.f32.mrb[0].mxu0
        %v316 = vadd.f32 0.0, %v315
        %v317 = vpop.f32.mrb[0].mxu0
        %318 = vmatprep.mubr.f32.mxu0 0.0
        %319 = vmatmul.mubr.f32.gmra.mrb[0].mxu0 %v191
        %v320 = vpop.f32.mrb[0].mxu0
        %v321 = vadd.f32 0.0, %v320
        %v322 = vpop.f32.mrb[0].mxu0
        %323 = vmatprep.mubr.f32.mxu0 0.0
        %324 = vmatmul.mubr.f32.gmra.mrb[0].mxu0 %v194
        %v325 = vpop.f32.mrb[0].mxu0
        %v326 = vadd.f32 0.0, %v325
        %v327 = vpop.f32.mrb[0].mxu0
        %328 = vmatprep.mubr.f32.mxu0 0.0
        %329 = vmatmul.mubr.f32.gmra.mrb[0].mxu0 %v197
        %v330 = vpop.f32.mrb[0].mxu0
        %v331 = vadd.f32 0.0, %v330
        %v332 = vpop.f32.mrb[0].mxu0
        %333 = vmatprep.mubr.f32.mxu0 0.0
        %334 = vmatmul.mubr.f32.gmra.mrb[0].mxu0 %v200
        %v335 = vpop.f32.mrb[0].mxu0
        %v336 = vadd.f32 0.0, %v335
        %v337 = vpop.f32.mrb[0].mxu0
        %338 = vmatprep.mubr.f32.mxu0 0.0
        %339 = vmatmul.mubr.f32.gmra.mrb[0].mxu0 %v203
        %v340 = vpop.f32.mrb[0].mxu0
        %v341 = vadd.f32 0.0, %v340
        %v342 = vpop.f32.mrb[0].mxu0
        %343 = vmatprep.mubr.f32.mxu0 0.0
        %344 = vmatmul.mubr.f32.gmra.mrb[0].mxu0 %v206
        %v345 = vpop.f32.mrb[0].mxu0
        %v346 = vadd.f32 0.0, %v345
        %v347 = vpop.f32.mrb[0].mxu0
        %348 = vmatprep.mubr.f32.mxu0 0.0
        %349 = vmatmul.mubr.f32.gmra.mrb[0].mxu0 %v209
        %v350 = vpop.f32.mrb[0].mxu0
        %v351 = vadd.f32 0.0, %v350
        %v352 = vpop.f32.mrb[0].mxu0
        %353 = vmatprep.mubr.f32.mxu0 0.0
        %354 = vmatmul.mubr.f32.gmra.mrb[0].mxu0 %v212
        %v355 = vpop.f32.mrb[0].mxu0
        %v356 = vadd.f32 0.0, %v355
        %v357 = vpop.f32.mrb[0].mxu0
        %358 = vdwg.mxu0
        %359 = vst [vmem:[%s137] sm:$0xff] %v281
        %360 = vst [vmem:[%s137 + $0x8] sm:$0xff] %v286
        %361 = vst [vmem:[%s137 + $0x10] sm:$0xff] %v291
        %362 = vst [vmem:[%s137 + $0x18] sm:$0xff] %v296
        %363 = vst [vmem:[%s137 + $0x20] sm:$0xff] %v301
        %364 = vst [vmem:[%s137 + $0x28] sm:$0xff] %v306
        %365 = vst [vmem:[%s137 + $0x30] sm:$0xff] %v311
        %366 = vst [vmem:[%s137 + $0x38] sm:$0xff] %v316
        %367 = vst [vmem:[%s137 + $0x40] sm:$0xff] %v321
        %368 = vst [vmem:[%s137 + $0x48] sm:$0xff] %v326
        %369 = vst [vmem:[%s137 + $0x50] sm:$0xff] %v331
        %370 = vst [vmem:[%s137 + $0x58] sm:$0xff] %v336
        %371 = vst [vmem:[%s137 + $0x60] sm:$0xff] %v341
        %372 = vst [vmem:[%s137 + $0x68] sm:$0xff] %v346
        %373 = vst [vmem:[%s137 + $0x70] sm:$0xff] %v351
        %374 = vst [vmem:[%s137 + $0x78] sm:$0xff] %v356
        %s375 = sand.u32 %s71, 1
        %s376 = scalar_lea.sflag [#allocation3], %s375
        %s377 = sand.u32 %s71, 1
        %s378 = smul.addr %s377, 128
        %s379 = scalar_lea.vmem [#allocation2], %s378
        // Predicated region
        $region29: #{tpu_custom_call.1} parent=27 // pred_check
          %p380 = pneg %p81
        $region30: #{tpu_custom_call.1} parent=27 // pred_check_branch
          %382 = sbr.rel (%p380) target = $region32
        $region31: #{tpu_custom_call.1} parent=27 // pred_region
          %s383 = smul.u32 16, %s16
          %s385 = ssub.s32 2048, 2048
          %386 = vsyncadd %s376, %s385
          %s387 = smul.addr %s383, 128
          %s388 = scalar_lea.hbm %s2, %s387
          %s389 = sshll.u32 %s379, 4
          %s390 = int_to_ptr.vmem [resolvable:$true] %s389
          %395 = dma.vmem_to_hbm [thread:$0]  %s390, 2048, %s388, %s376, 128, 128, 8
        $region32: #{tpu_custom_call.1} parent=27 // pred_fallthru
          _
      $region28: #{tpu_custom_call.1} parent=5 // pred_fallthru
        _
      %p396 = scmp.le.s32.totalorder 2, %s11
      // Predicated region
      $region33: #{tpu_custom_call.1} parent=5 // pred_check
        %p397 = pneg %p396
      $region34: #{tpu_custom_call.1} parent=5 // pred_check_branch
        %399 = sbr.rel (%p397) target = $region36
      $region35: #{tpu_custom_call.1} parent=5 // pred_region
        %s400 = ssub.s32 %s11, 2
        // Predicated region
        $region37: #{tpu_custom_call.1} parent=35 // pred_check
          %p401 = pneg %p87
        $region38: #{tpu_custom_call.1} parent=35 // pred_check_branch
          %403 = sbr.rel (%p401) target = $region40
        $region39: #{tpu_custom_call.1} parent=35 // pred_region
          %s404 = sand.u32 %s72, 1
          %s405 = scalar_lea.sflag [#allocation3], %s404
          %s406 = sand.u32 %s72, 1
          %s407 = smul.addr %s406, 128
          %s408 = scalar_lea.vmem [#allocation2], %s407
          %409 = dma.done %s405, 2048
        $region40: #{tpu_custom_call.1} parent=35 // pred_fallthru
          _
      $region36: #{tpu_custom_call.1} parent=5 // pred_fallthru
        _
    $region6: #{tpu_custom_call.1} parent=1 // loop_footer
      %s15 = sadd.s32 1, %s11
    $region7: #{tpu_custom_call.1} parent=1 // loop_footer_branch
      %10 = sbr.rel target = $region3
    $region8: #{tpu_custom_call.1} parent=1 // loop_exit
      _
    %410 = vsyncpa [#allocation3], 1
    %s411 = scalar_lea.sflag [#allocation3], 1
    %412 = vsyncpa %s411, 1

</llo_original>
